<compile_context>
chip_gen: v5e
topology: v5e:2x2
jax: 0.10.0
libtpu: 0.0.40
codegen_flags: <defaults>
</compile_context>

<pallas_src>
import numpy as np
import jax
import jax.numpy as jnp
from jax.experimental import pallas as pl
from jax.experimental.pallas import tpu as pltpu

# ----------------------------- configuration -------------------------------
B = 2                      # number of graphs in the batch
N_NODES = (6, 8)           # nodes per graph
N_MAX = max(N_NODES)
N_SUM = sum(N_NODES)
N_TOT = B * N_MAX          # padded row layout length
D_PE = 8                   # eigenvalue / PE dimension
D_OUT_PAD = 128            # lane-dense padded output width (sliced to D_PE outside)
M_PSI = 3                  # number of psi networks (last dim of each W in W_list)
H_PSI = 16                 # psi hidden width
H_PHI = 32                 # phi (GIN MLP) hidden width
KW = N_MAX * H_PHI         # lane-dense feature width (= 256 lanes)
EPS_GIN = 0.1              # GIN epsilon (deterministic parameter)


# ----------------- fused Pallas kernel (whole batch, one step) --------------
def _fused_phi_kernel(vblk_ref, ustk_ref, a_ref, b1t_ref, maskt_ref,
                      w2rep_ref, bias_ref, out_ref):
    # G[i, k*H_PHI+h] = (W[i, k, :] @ w1)[h]  -- w1 folded into V diag(Z) V^T,
    # block-diagonal V so one MXU pass covers every graph in the batch.
    G = jnp.dot(vblk_ref[...], ustk_ref[...],
                preferred_element_type=jnp.float32)            # [N_TOT, KW]
    # 1-layer GIN sum aggregation; linear, so it commutes with the w1 fold.
    H = (1.0 + EPS_GIN) * G + jnp.dot(a_ref[...], G,
                                      preferred_element_type=jnp.float32)
    # masked ReLU features (column mask k < n_b, pre-tiled over the H_PHI lanes).
    H1 = jnp.maximum(H + b1t_ref[...], 0.0) * maskt_ref[...]
    # masked sum-pool over k folded into the last matmul: W2rep = tile(w2, N_MAX)
    # zero-padded to 128 lanes; bias_ref = n_valid(row) * b2 (b2 is k-uniform, so
    # mask-before-w2 + n_valid*b2 == reference's mask-after-w2).
    out_ref[...] = (jnp.dot(H1, w2rep_ref[...],
                            preferred_element_type=jnp.float32)
                    + bias_ref[...])                           # [N_TOT, 128]


# --------------------------- psi (shared helper) ----------------------------
def _masked_psi(Lambda, eig_mask, params):
    # psi_m: scalar 2-layer MLP (1 -> H_PSI -> 1), output masked by (d < N_b).
    lam = Lambda[:, :, None, None]                                        # [B, D_PE, 1, 1]
    h = jax.nn.relu(lam * params["psi_w1"][None, None]
                    + params["psi_b1"][None, None])                       # [B, D_PE, M, H_PSI]
    z = jnp.sum(h * params["psi_w2"][None, None], axis=-1)                # [B, D_PE, M]
    z = z + params["psi_b2"][None, None, :, 0]
    return z * eig_mask[..., None]                                        # [B, D_PE, M]


# --------------------------------- wrapper ----------------------------------
def build_gin_deepsets_phi(batch_np):
    """Static (per-batch-structure) precompute + jitted forward. Assumes PyG-style
    batching: nodes of each graph are contiguous and ordered by graph id."""
    batch_np = np.asarray(batch_np)
    counts = np.bincount(batch_np, minlength=B)
    offsets = np.concatenate([[0], np.cumsum(counts)]).astype(np.int64)

    # eigenvalue mask for psi
    eig_mask = jnp.asarray(
        (np.arange(D_PE)[None, :] < counts[:, None]).astype(np.float32))   # [B, D_PE]
    # padded-row -> global-node gather (clamped, invalid slots masked to 0)
    k_idx = np.arange(N_MAX)
    row_valid_np = (k_idx[None, :] < counts[:, None])                       # [B, N_MAX]
    row_src = jnp.asarray(
        np.minimum(offsets[:B, None] + k_idx[None, :], N_SUM - 1).astype(np.int32))
    row_valid = jnp.asarray(row_valid_np.astype(np.float32))
    # global node -> padded row index
    glob_to_pad = jnp.asarray(np.concatenate(
        [b * N_MAX + np.arange(counts[b]) for b in range(B)]).astype(np.int32))
    # column mask tiled over the H_PHI lanes, repeated to every padded row
    col_mask = np.repeat(row_valid_np.astype(np.float32), H_PHI, axis=1)    # [B, KW]
    maskt = jnp.asarray(np.repeat(col_mask, N_MAX, axis=0))                 # [N_TOT, KW]
    nvalid_row = jnp.asarray(
        np.repeat(counts.astype(np.float32), N_MAX)[:, None])               # [N_TOT, 1]
    eyeB = jnp.asarray(np.eye(B, dtype=np.float32))

    @jax.jit
    def forward(Lambda, V, edge_index, params):
        # psi + the w1 fold (tiny, stays in plain JAX)
        Z = _masked_psi(Lambda, eig_mask, params)                  # [B, D_PE, M]
        Y = jnp.einsum('bdm,mh->bdh', Z, params["phi_w1"])         # [B, D_PE, H_PHI]

        # per-graph zero-padded eigenvectors via a single static gather
        V_pad = V[row_src] * row_valid[..., None]                  # [B, N_MAX, D_PE]

        # block-diagonal V and the stacked lane-dense U slab
        Vblk = jnp.einsum('bkd,bc->bkcd', V_pad, eyeB).reshape(N_TOT, B * D_PE)
        Ustk = jnp.einsum('bkd,bdh->bdkh', V_pad, Y).reshape(B * D_PE, KW)

        # dense adjacency on the padded row layout (A[dst, src] = #edges)
        p_src = glob_to_pad[edge_index[0]]
        p_dst = glob_to_pad[edge_index[1]]
        A = jnp.zeros((N_TOT, N_TOT), jnp.float32).at[p_dst, p_src].add(1.0)

        # pre-tiled bias / weights (constant per call, lane-dense)
        b1t = jnp.tile(params["phi_b1"], (1, N_MAX))               # [1, KW]
        w2rep = jnp.pad(jnp.tile(params["phi_w2"], (N_MAX, 1)),
                        ((0, 0), (0, D_OUT_PAD - D_PE)))           # [KW, 128]
        b2pad = jnp.pad(params["phi_b2"], ((0, 0), (0, D_OUT_PAD - D_PE)))
        bias_rows = nvalid_row * b2pad                             # [N_TOT, 128]

        out_pad = pl.pallas_call(
            _fused_phi_kernel,
            out_shape=jax.ShapeDtypeStruct((N_TOT, D_OUT_PAD), jnp.float32),
            grid=(1,),
            in_specs=[
                pl.BlockSpec((N_TOT, B * D_PE), lambda i: (0, 0)),
                pl.BlockSpec((B * D_PE, KW), lambda i: (0, 0)),
                pl.BlockSpec((N_TOT, N_TOT), lambda i: (0, 0)),
                pl.BlockSpec((1, KW), lambda i: (0, 0)),
                pl.BlockSpec((N_TOT, KW), lambda i: (0, 0)),
                pl.BlockSpec((KW, D_OUT_PAD), lambda i: (0, 0)),
                pl.BlockSpec((N_TOT, D_OUT_PAD), lambda i: (0, 0)),
            ],
            out_specs=pl.BlockSpec((N_TOT, D_OUT_PAD), lambda i: (0, 0)),
            compiler_params=pltpu.CompilerParams(
                dimension_semantics=("arbitrary",)),
        )(Vblk, Ustk, A, b1t, maskt, w2rep, bias_rows)

        # drop padded rows (garbage by design) and the lane padding -> [N_SUM, D_PE]
        return out_pad[glob_to_pad, :D_PE]

    return forward


# ------------------------- pure-JAX reference (check) -----------------------
def reference_forward(Lambda, V, edge_index, batch, params):
    batch_np = np.asarray(batch)
    counts = np.bincount(batch_np, minlength=B)
    offsets = np.concatenate([[0], np.cumsum(counts)]).astype(np.int64)
    eig_mask = jnp.asarray(
        (np.arange(D_PE)[None, :] < counts[:, None]).astype(np.float32))
    Z = _masked_psi(Lambda, eig_mask, params)                             # [B, D_PE, M]

    # W_list + padding + mask exactly as in GINDeepSetsPhi.forward
    w_rows, mask_rows = [], []
    for b in range(B):
        n = int(counts[b])
        Vb = V[offsets[b]:offsets[b] + n]
        Wb = jnp.einsum('nd,dm,kd->nkm', Vb, Z[b], Vb)                    # [n, n, M]
        w_rows.append(jnp.pad(Wb, ((0, 0), (0, N_MAX - n), (0, 0))))
        mask_rows.append(np.tile(np.arange(N_MAX) < n, (n, 1)))
    W = jnp.concatenate(w_rows, axis=0)                                   # [N_SUM, N_MAX, M]
    mask = jnp.asarray(np.concatenate(mask_rows, 0).astype(np.float32))[..., None]

    A = jnp.zeros((N_SUM, N_SUM)).at[edge_index[1], edge_index[0]].add(1.0)
    H = (1.0 + EPS_GIN) * W + jnp.einsum('ij,jkm->ikm', A, W)
    h1 = jax.nn.relu(jnp.einsum('ikm,mh->ikh', H, params["phi_w1"]) + params["phi_b1"][0])
    PE = jnp.einsum('ikh,hd->ikd', h1, params["phi_w2"]) + params["phi_b2"][0]
    return (PE * mask).sum(axis=1)                                        # [N_SUM, D_PE]


# ----------------------------------- main ------------------------------------
if __name__ == "__main__":
    key = jax.random.PRNGKey(0)
    ks = jax.random.split(key, 10)
    params = {
        "psi_w1": jax.random.normal(ks[0], (M_PSI, H_PSI), jnp.float32) * 0.5,
        "psi_b1": jax.random.normal(ks[1], (M_PSI, H_PSI), jnp.float32) * 0.1,
        "psi_w2": jax.random.normal(ks[2], (M_PSI, H_PSI), jnp.float32) * 0.5,
        "psi_b2": jax.random.normal(ks[3], (M_PSI, 1), jnp.float32) * 0.1,
        "phi_w1": jax.random.normal(ks[4], (M_PSI, H_PHI), jnp.float32) * 0.5,
        "phi_b1": jax.random.normal(ks[5], (1, H_PHI), jnp.float32) * 0.1,
        "phi_w2": jax.random.normal(ks[6], (H_PHI, D_PE), jnp.float32) * 0.3,
        "phi_b2": jax.random.normal(ks[7], (1, D_PE), jnp.float32) * 0.1,
    }

    Lambda = jax.random.normal(ks[8], (B, D_PE), jnp.float32)             # [B, D_pe]
    V = jax.random.normal(ks[9], (N_SUM, D_PE), jnp.float32) * 0.5        # [N_sum, D_pe]
    batch = jnp.asarray(np.repeat(np.arange(B), N_NODES).astype(np.int32))

    # bidirectional ring edges inside each graph -> edge_index [2, E_sum]
    src, dst = [], []
    start = 0
    for n in N_NODES:
        for i in range(n):
            a, c = start + i, start + (i + 1) % n
            src += [a, c]
            dst += [c, a]
        start += n
    edge_index = jnp.asarray(np.array([src, dst], dtype=np.int32))        # [2, 28]

    forward = build_gin_deepsets_phi(np.asarray(batch))
    out = jax.block_until_ready(forward(Lambda, V, edge_index, params))

    ref = jax.block_until_ready(reference_forward(Lambda, V, edge_index, batch, params))
    assert out.shape == (N_SUM, D_PE)
    assert np.allclose(np.asarray(out), np.asarray(ref), rtol=5e-3, atol=5e-3), (
        "mismatch vs. reference")
    print("KERNEL_OK")
</pallas_src>

<mosaic_0001>
module attributes {stable_mosaic.version = 11 : i64} {
  func.func @_fused_phi_kernel(%arg0: i32, %arg1: memref<16x16xf32, #tpu.memory_space<vmem>>, %arg2: memref<16x256xf32, #tpu.memory_space<vmem>>, %arg3: memref<16x16xf32, #tpu.memory_space<vmem>>, %arg4: memref<1x256xf32, #tpu.memory_space<vmem>>, %arg5: memref<16x256xf32, #tpu.memory_space<vmem>>, %arg6: memref<256x128xf32, #tpu.memory_space<vmem>>, %arg7: memref<16x128xf32, #tpu.memory_space<vmem>>, %arg8: memref<16x128xf32, #tpu.memory_space<vmem>>) attributes {dimension_semantics = [#tpu.dimension_semantics<arbitrary>], iteration_bounds = array<i64: 1>, scalar_prefetch = 0 : i64, scratch_operands = 0 : i64, tpu.core_type = #tpu.core_type<tc>, window_params = [{pipeline_mode = #tpu.pipeline_mode<synchronous>, transform_indices = @transform_0, window_bounds = array<i64: 16, 16>}, {pipeline_mode = #tpu.pipeline_mode<synchronous>, transform_indices = @transform_1, window_bounds = array<i64: 16, 256>}, {pipeline_mode = #tpu.pipeline_mode<synchronous>, transform_indices = @transform_2, window_bounds = array<i64: 16, 16>}, {pipeline_mode = #tpu.pipeline_mode<synchronous>, transform_indices = @transform_3, window_bounds = array<i64: 1, 256>}, {pipeline_mode = #tpu.pipeline_mode<synchronous>, transform_indices = @transform_4, window_bounds = array<i64: 16, 256>}, {pipeline_mode = #tpu.pipeline_mode<synchronous>, transform_indices = @transform_5, window_bounds = array<i64: 256, 128>}, {pipeline_mode = #tpu.pipeline_mode<synchronous>, transform_indices = @transform_6, window_bounds = array<i64: 16, 128>}, {pipeline_mode = #tpu.pipeline_mode<synchronous>, transform_indices = @transform_7, window_bounds = array<i64: 16, 128>}]} {
    %c0 = arith.constant 0 : index
    %c0_0 = arith.constant 0 : index
    %0 = vector.load %arg1[%c0, %c0_0] : memref<16x16xf32, #tpu.memory_space<vmem>>, vector<16x16xf32>
    %c0_1 = arith.constant 0 : index
    %c0_2 = arith.constant 0 : index
    %1 = vector.load %arg2[%c0_1, %c0_2] : memref<16x256xf32, #tpu.memory_space<vmem>>, vector<16x256xf32>
    %cst = arith.constant dense<0.000000e+00> : vector<16x256xf32>
    %2 = tpu.matmul %0, %1, %cst {dimension_numbers = #tpu.dot_dimension_numbers<[1], [0], [0], [1], [0, 0, 1, 1], [], []>} : vector<16x16xf32>, vector<16x256xf32>, vector<16x256xf32> -> vector<16x256xf32>
    %cst_3 = arith.constant 1.100000e+00 : f32
    %3 = vector.broadcast %cst_3 : f32 to vector<16x256xf32>
    %4 = arith.mulf %3, %2 : vector<16x256xf32>
    %c0_4 = arith.constant 0 : index
    %c0_5 = arith.constant 0 : index
    %5 = vector.load %arg3[%c0_4, %c0_5] : memref<16x16xf32, #tpu.memory_space<vmem>>, vector<16x16xf32>
    %cst_6 = arith.constant dense<0.000000e+00> : vector<16x256xf32>
    %6 = tpu.matmul %5, %2, %cst_6 {dimension_numbers = #tpu.dot_dimension_numbers<[1], [0], [0], [1], [0, 0, 1, 1], [], []>} : vector<16x16xf32>, vector<16x256xf32>, vector<16x256xf32> -> vector<16x256xf32>
    %7 = arith.addf %4, %6 : vector<16x256xf32>
    %c0_7 = arith.constant 0 : index
    %c0_8 = arith.constant 0 : index
    %8 = vector.load %arg4[%c0_7, %c0_8] : memref<1x256xf32, #tpu.memory_space<vmem>>, vector<1x256xf32>
    %9 = vector.broadcast %8 : vector<1x256xf32> to vector<16x256xf32>
    %10 = arith.addf %7, %9 : vector<16x256xf32>
    %cst_9 = arith.constant 0.000000e+00 : f32
    %11 = vector.broadcast %cst_9 : f32 to vector<16x256xf32>
    %12 = arith.maximumf %10, %11 : vector<16x256xf32>
    %c0_10 = arith.constant 0 : index
    %c0_11 = arith.constant 0 : index
    %13 = vector.load %arg5[%c0_10, %c0_11] : memref<16x256xf32, #tpu.memory_space<vmem>>, vector<16x256xf32>
    %14 = arith.mulf %12, %13 : vector<16x256xf32>
    %c0_12 = arith.constant 0 : index
    %c0_13 = arith.constant 0 : index
    %15 = vector.load %arg6[%c0_12, %c0_13] : memref<256x128xf32, #tpu.memory_space<vmem>>, vector<256x128xf32>
    %cst_14 = arith.constant dense<0.000000e+00> : vector<16x128xf32>
    %16 = tpu.matmul %14, %15, %cst_14 {dimension_numbers = #tpu.dot_dimension_numbers<[1], [0], [0], [1], [0, 0, 1, 1], [], []>} : vector<16x256xf32>, vector<256x128xf32>, vector<16x128xf32> -> vector<16x128xf32>
    %c0_15 = arith.constant 0 : index
    %c0_16 = arith.constant 0 : index
    %17 = vector.load %arg7[%c0_15, %c0_16] : memref<16x128xf32, #tpu.memory_space<vmem>>, vector<16x128xf32>
    %18 = arith.addf %16, %17 : vector<16x128xf32>
    %c0_17 = arith.constant 0 : index
    %c0_18 = arith.constant 0 : index
    %19 = vector.load %arg8[%c0_17, %c0_18] : memref<16x128xf32, #tpu.memory_space<vmem>>, vector<16x128xf32>
    tpu.vector_store %arg8[%c0_17, %c0_18], %18 {strides = array<i32>} : memref<16x128xf32, #tpu.memory_space<vmem>>, vector<16x128xf32>,
    return
  }
  func.func @transform_0(%arg0: i32) -> (i32, i32) {
    %c0_i32 = arith.constant 0 : i32
    %c0_i32_0 = arith.constant 0 : i32
    %c0_i32_1 = arith.constant 0 : i32
    return %c0_i32, %c0_i32_0 : i32, i32
  }
  func.func @transform_1(%arg0: i32) -> (i32, i32) {
    %c0_i32 = arith.constant 0 : i32
    %c0_i32_0 = arith.constant 0 : i32
    %c0_i32_1 = arith.constant 0 : i32
    return %c0_i32, %c0_i32_0 : i32, i32
  }
  func.func @transform_2(%arg0: i32) -> (i32, i32) {
    %c0_i32 = arith.constant 0 : i32
    %c0_i32_0 = arith.constant 0 : i32
    %c0_i32_1 = arith.constant 0 : i32
    return %c0_i32, %c0_i32_0 : i32, i32
  }
  func.func @transform_3(%arg0: i32) -> (i32, i32) {
    %c0_i32 = arith.constant 0 : i32
    %c0_i32_0 = arith.constant 0 : i32
    %c0_i32_1 = arith.constant 0 : i32
    return %c0_i32, %c0_i32_0 : i32, i32
  }
  func.func @transform_4(%arg0: i32) -> (i32, i32) {
    %c0_i32 = arith.constant 0 : i32
    %c0_i32_0 = arith.constant 0 : i32
    %c0_i32_1 = arith.constant 0 : i32
    return %c0_i32, %c0_i32_0 : i32, i32
  }
  func.func @transform_5(%arg0: i32) -> (i32, i32) {
    %c0_i32 = arith.constant 0 : i32
    %c0_i32_0 = arith.constant 0 : i32
    %c0_i32_1 = arith.constant 0 : i32
    return %c0_i32, %c0_i32_0 : i32, i32
  }
  func.func @transform_6(%arg0: i32) -> (i32, i32) {
    %c0_i32 = arith.constant 0 : i32
    %c0_i32_0 = arith.constant 0 : i32
    %c0_i32_1 = arith.constant 0 : i32
    return %c0_i32, %c0_i32_0 : i32, i32
  }
  func.func @transform_7(%arg0: i32) -> (i32, i32) {
    %c0_i32 = arith.constant 0 : i32
    %c0_i32_0 = arith.constant 0 : i32
    %c0_i32_1 = arith.constant 0 : i32
    return %c0_i32, %c0_i32_0 : i32, i32
  }
}

</mosaic_0001>

<llo_original>
// kernel: custom-call.8
$region0: #{custom-call.8}
  %s0 = inlined_call_operand.vmem [shape: f32[14,8], index: 0, kind: output, shape index: {}]

// kernel: forward.1
$region0: #{forward.1}
  #allocation0 [shape = 'u32[]', space=smem, size = 0x4, offset = 0x4, fixed_abs, tag = 'smem constant byte address 0x4 - core index']
  #allocation1 [shape = 'u32[72,128]{1,0:T(1,128)}', space=vmem, size = 0x9000, scoped, tag = 'internal scratch']
  %s0 = inlined_call_operand.vmem [shape: f32[16,16], index: 0, kind: input, shape index: {}]
  %s1 = inlined_call_operand.vmem [shape: f32[16,256], index: 1, kind: input, shape index: {}]
  %s2 = inlined_call_operand.vmem [shape: f32[16,16], index: 2, kind: input, shape index: {}]
  %s3 = inlined_call_operand.vmem [shape: f32[1,256], index: 3, kind: input, shape index: {}]
  %s4 = inlined_call_operand.vmem [shape: f32[16,256], index: 4, kind: input, shape index: {}]
  %s5 = inlined_call_operand.vmem [shape: f32[256,128], index: 5, kind: input, shape index: {}]
  %s6 = inlined_call_operand.vmem [shape: f32[16,128], index: 6, kind: input, shape index: {}]
  %s7 = inlined_call_operand.vmem [shape: f32[16,128], index: 7, kind: output, shape index: {}]
  %s8 = sld [smem:[#allocation0]]
  $region38: #{forward.1} parent=0
    _
  %s10 = ssub.s32 1, %s8
  %s11 = scalar_select 0, %s10, %s8
  // Predicated region
  $region2: #{forward.1} parent=0 // pred_check
    _
  $region3: #{forward.1} parent=0 // pred_check_branch
    %13 = sbr.rel (0) target = $region5
  $region4: #{forward.1} parent=0 // pred_region
    _
  $region5: #{forward.1} parent=0 // pred_fallthru
    _
  // Predicated region
  $region6: #{forward.1} parent=0 // pred_check
    _
  $region7: #{forward.1} parent=0 // pred_check_branch
    %15 = sbr.rel (0) target = $region9
  $region8: #{forward.1} parent=0 // pred_region
    _
  $region9: #{forward.1} parent=0 // pred_fallthru
    _
  // Predicated region
  $region10: #{forward.1} parent=0 // pred_check
    _
  $region11: #{forward.1} parent=0 // pred_check_branch
    %17 = sbr.rel (0) target = $region13
  $region12: #{forward.1} parent=0 // pred_region
    _
  $region13: #{forward.1} parent=0 // pred_fallthru
    _
  // Predicated region
  $region14: #{forward.1} parent=0 // pred_check
    _
  $region15: #{forward.1} parent=0 // pred_check_branch
    %19 = sbr.rel (0) target = $region17
  $region16: #{forward.1} parent=0 // pred_region
    _
  $region17: #{forward.1} parent=0 // pred_fallthru
    _
  // Predicated region
  $region18: #{forward.1} parent=0 // pred_check
    _
  $region19: #{forward.1} parent=0 // pred_check_branch
    %21 = sbr.rel (0) target = $region21
  $region20: #{forward.1} parent=0 // pred_region
    _
  $region21: #{forward.1} parent=0 // pred_fallthru
    _
  // Predicated region
  $region22: #{forward.1} parent=0 // pred_check
    _
  $region23: #{forward.1} parent=0 // pred_check_branch
    %23 = sbr.rel (0) target = $region25
  $region24: #{forward.1} parent=0 // pred_region
    _
  $region25: #{forward.1} parent=0 // pred_fallthru
    _
  // Predicated region
  $region26: #{forward.1} parent=0 // pred_check
    _
  $region27: #{forward.1} parent=0 // pred_check_branch
    %25 = sbr.rel (0) target = $region29
  $region28: #{forward.1} parent=0 // pred_region
    _
  $region29: #{forward.1} parent=0 // pred_fallthru
    _
  %v26 = vld [vmem:[%s0] sm:$0xff]
  %v27 = vld [vmem:[%s0 + $0x8] sm:$0xff]
  %v28 = vld [vmem:[%s1] sm:$0xff]
  %v29 = vld [vmem:[%s1 + $0x8] sm:$0xff]
  %v30 = vld [vmem:[%s1 + $0x10] sm:$0xff]
  %v31 = vld [vmem:[%s1 + $0x18] sm:$0xff]
  %vm32 = vcmask 130048
  %v34 = vsel %vm32, %v26, 0
  %v37 = vsel %vm32, %v27, 0
  %39 = vmatpush.msra.mxu0 0.0
  %40 = vmatpush.msra.mxu0 0.0
  %41 = vmatpush.msra.mxu0 0.0
  %42 = vmatpush.msra.mxu0 0.0
  %43 = vmatpush.msra.mxu0 0.0
  %44 = vmatpush.msra.mxu0 0.0
  %45 = vmatpush.msra.mxu0 0.0
  %46 = vmatpush.msra.mxu0 0.0
  %47 = vmatpush.msra.mxu0 0.0
  %48 = vmatpush.msra.mxu0 0.0
  %49 = vmatpush.msra.mxu0 0.0
  %50 = vmatpush.msra.mxu0 0.0
  %51 = vmatpush.msra.mxu0 0.0
  %52 = vmatpush.msra.mxu0 0.0
  %53 = vmatpush.msra.mxu0 %v30
  %54 = vmatpush.msra.mxu0 %v28
  %55 = vmatmul.f32.gmra.mxu0 %v34
  %v56 = vpop.f32.mrf.mxu0
  %v57 = vadd.f32 0.0, %v56
  %58 = vmatmul.f32.gmra.mxu0 %v37
  %v59 = vpop.f32.mrf.mxu0
  %v60 = vadd.f32 0.0, %v59
  %61 = vdwg.mxu0
  %62 = vmatpush.msra.mxu0 0.0
  %63 = vmatpush.msra.mxu0 0.0
  %64 = vmatpush.msra.mxu0 0.0
  %65 = vmatpush.msra.mxu0 0.0
  %66 = vmatpush.msra.mxu0 0.0
  %67 = vmatpush.msra.mxu0 0.0
  %68 = vmatpush.msra.mxu0 0.0
  %69 = vmatpush.msra.mxu0 0.0
  %70 = vmatpush.msra.mxu0 0.0
  %71 = vmatpush.msra.mxu0 0.0
  %72 = vmatpush.msra.mxu0 0.0
  %73 = vmatpush.msra.mxu0 0.0
  %74 = vmatpush.msra.mxu0 0.0
  %75 = vmatpush.msra.mxu0 0.0
  %76 = vmatpush.msra.mxu0 %v31
  %77 = vmatpush.msra.mxu0 %v29
  %78 = vmatmul.f32.gmra.mxu0 %v34
  %v79 = vpop.f32.mrf.mxu0
  %v80 = vadd.f32 0.0, %v79
  %81 = vmatmul.f32.gmra.mxu0 %v37
  %v82 = vpop.f32.mrf.mxu0
  %v83 = vadd.f32 0.0, %v82
  %84 = vdwg.mxu0
  %v85 = vmul.f32 %v57, 1.1
  %v86 = vmul.f32 %v80, 1.1
  %v87 = vmul.f32 %v60, 1.1
  %v88 = vmul.f32 %v83, 1.1
  %v89 = vld [vmem:[%s2] sm:$0xff]
  %v90 = vld [vmem:[%s2 + $0x8] sm:$0xff]
  %v92 = vsel %vm32, %v89, 0
  %v95 = vsel %vm32, %v90, 0
  %97 = vmatpush.msra.mxu0 0.0
  %98 = vmatpush.msra.mxu0 0.0
  %99 = vmatpush.msra.mxu0 0.0
  %100 = vmatpush.msra.mxu0 0.0
  %101 = vmatpush.msra.mxu0 0.0
  %102 = vmatpush.msra.mxu0 0.0
  %103 = vmatpush.msra.mxu0 0.0
  %104 = vmatpush.msra.mxu0 0.0
  %105 = vmatpush.msra.mxu0 0.0
  %106 = vmatpush.msra.mxu0 0.0
  %107 = vmatpush.msra.mxu0 0.0
  %108 = vmatpush.msra.mxu0 0.0
  %109 = vmatpush.msra.mxu0 0.0
  %110 = vmatpush.msra.mxu0 0.0
  %111 = vmatpush.msra.mxu0 %v60
  %112 = vmatpush.msra.mxu0 %v57
  %113 = vmatmul.f32.gmra.mxu0 %v92
  %v114 = vpop.f32.mrf.mxu0
  %v115 = vadd.f32 0.0, %v114
  %116 = vmatmul.f32.gmra.mxu0 %v95
  %v117 = vpop.f32.mrf.mxu0
  %v118 = vadd.f32 0.0, %v117
  %119 = vdwg.mxu0
  %120 = vmatpush.msra.mxu0 0.0
  %121 = vmatpush.msra.mxu0 0.0
  %122 = vmatpush.msra.mxu0 0.0
  %123 = vmatpush.msra.mxu0 0.0
  %124 = vmatpush.msra.mxu0 0.0
  %125 = vmatpush.msra.mxu0 0.0
  %126 = vmatpush.msra.mxu0 0.0
  %127 = vmatpush.msra.mxu0 0.0
  %128 = vmatpush.msra.mxu0 0.0
  %129 = vmatpush.msra.mxu0 0.0
  %130 = vmatpush.msra.mxu0 0.0
  %131 = vmatpush.msra.mxu0 0.0
  %132 = vmatpush.msra.mxu0 0.0
  %133 = vmatpush.msra.mxu0 0.0
  %134 = vmatpush.msra.mxu0 %v83
  %135 = vmatpush.msra.mxu0 %v80
  %136 = vmatmul.f32.gmra.mxu0 %v92
  %v137 = vpop.f32.mrf.mxu0
  %v138 = vadd.f32 0.0, %v137
  %139 = vmatmul.f32.gmra.mxu0 %v95
  %v140 = vpop.f32.mrf.mxu0
  %v141 = vadd.f32 0.0, %v140
  %142 = vdwg.mxu0
  %v143 = vadd.f32 %v85, %v115
  %v144 = vadd.f32 %v86, %v138
  %v145 = vadd.f32 %v87, %v118
  %v146 = vadd.f32 %v88, %v141
  %v147 = vld [vmem:[%s3] sm:$0x3]
  %v149 = vperm.slane %v147, 0
  %v150 = vperm.slane %v147, 1
  %v153 = vadd.f32 %v143, %v149
  %v154 = vadd.f32 %v144, %v150
  %v155 = vadd.f32 %v145, %v149
  %v156 = vadd.f32 %v146, %v150
  %v157 = vmax.f32 %v153, 0.0
  %v158 = vmax.f32 %v154, 0.0
  %v159 = vmax.f32 %v155, 0.0
  %v160 = vmax.f32 %v156, 0.0
  %v161 = vld [vmem:[%s4] sm:$0xff]
  %v162 = vld [vmem:[%s4 + $0x8] sm:$0xff]
  %v163 = vld [vmem:[%s4 + $0x10] sm:$0xff]
  %v164 = vld [vmem:[%s4 + $0x18] sm:$0xff]
  %v165 = vmul.f32 %v157, %v161
  %v166 = vmul.f32 %v158, %v162
  %v167 = vmul.f32 %v159, %v163
  %v168 = vmul.f32 %v160, %v164
  %v169 = vld [vmem:[%s5] sm:$0xff]
  %v170 = vld [vmem:[%s5 + $0x8] sm:$0xff]
  %v171 = vld [vmem:[%s5 + $0x10] sm:$0xff]
  %v172 = vld [vmem:[%s5 + $0x18] sm:$0xff]
  %v173 = vld [vmem:[%s5 + $0x20] sm:$0xff]
  %v174 = vld [vmem:[%s5 + $0x28] sm:$0xff]
  %v175 = vld [vmem:[%s5 + $0x30] sm:$0xff]
  %v176 = vld [vmem:[%s5 + $0x38] sm:$0xff]
  %v177 = vld [vmem:[%s5 + $0x40] sm:$0xff]
  %v178 = vld [vmem:[%s5 + $0x48] sm:$0xff]
  %v179 = vld [vmem:[%s5 + $0x50] sm:$0xff]
  %v180 = vld [vmem:[%s5 + $0x58] sm:$0xff]
  %v181 = vld [vmem:[%s5 + $0x60] sm:$0xff]
  %v182 = vld [vmem:[%s5 + $0x68] sm:$0xff]
  %v183 = vld [vmem:[%s5 + $0x70] sm:$0xff]
  %v184 = vld [vmem:[%s5 + $0x78] sm:$0xff]
  %v185 = vld [vmem:[%s5 + $0x80] sm:$0xff]
  %v186 = vld [vmem:[%s5 + $0x88] sm:$0xff]
  %v187 = vld [vmem:[%s5 + $0x90] sm:$0xff]
  %v188 = vld [vmem:[%s5 + $0x98] sm:$0xff]
  %v189 = vld [vmem:[%s5 + $0xa0] sm:$0xff]
  %v190 = vld [vmem:[%s5 + $0xa8] sm:$0xff]
  %v191 = vld [vmem:[%s5 + $0xb0] sm:$0xff]
  %v192 = vld [vmem:[%s5 + $0xb8] sm:$0xff]
  %v193 = vld [vmem:[%s5 + $0xc0] sm:$0xff]
  %v194 = vld [vmem:[%s5 + $0xc8] sm:$0xff]
  %v195 = vld [vmem:[%s5 + $0xd0] sm:$0xff]
  %v196 = vld [vmem:[%s5 + $0xd8] sm:$0xff]
  %v197 = vld [vmem:[%s5 + $0xe0] sm:$0xff]
  %v198 = vld [vmem:[%s5 + $0xe8] sm:$0xff]
  %v199 = vld [vmem:[%s5 + $0xf0] sm:$0xff]
  %v200 = vld [vmem:[%s5 + $0xf8] sm:$0xff]
  %v201 = vld [vmem:[%s6] sm:$0xff]
  %v202 = vld [vmem:[%s6 + $0x8] sm:$0xff]
  %203 = vmatpush.msra.mxu0 %v184
  %204 = vmatpush.msra.mxu0 %v183
  %205 = vmatpush.msra.mxu0 %v182
  %206 = vmatpush.msra.mxu0 %v181
  %207 = vmatpush.msra.mxu0 %v180
  %208 = vmatpush.msra.mxu0 %v179
  %209 = vmatpush.msra.mxu0 %v178
  %210 = vmatpush.msra.mxu0 %v177
  %211 = vmatpush.msra.mxu0 %v176
  %212 = vmatpush.msra.mxu0 %v175
  %213 = vmatpush.msra.mxu0 %v174
  %214 = vmatpush.msra.mxu0 %v173
  %215 = vmatpush.msra.mxu0 %v172
  %216 = vmatpush.msra.mxu0 %v171
  %217 = vmatpush.msra.mxu0 %v170
  %218 = vmatpush.msra.mxu0 %v169
  %219 = vmatmul.f32.gmra.mxu0 %v165
  %v220 = vpop.f32.mrf.mxu0
  %v221 = vadd.f32 %v201, %v220
  %222 = vmatmul.f32.gmra.mxu0 %v167
  %v223 = vpop.f32.mrf.mxu0
  %v224 = vadd.f32 %v202, %v223
  %225 = vdwg.mxu0
  %226 = vmatpush.msra.mxu0 %v200
  %227 = vmatpush.msra.mxu0 %v199
  %228 = vmatpush.msra.mxu0 %v198
  %229 = vmatpush.msra.mxu0 %v197
  %230 = vmatpush.msra.mxu0 %v196
  %231 = vmatpush.msra.mxu0 %v195
  %232 = vmatpush.msra.mxu0 %v194
  %233 = vmatpush.msra.mxu0 %v193
  %234 = vmatpush.msra.mxu0 %v192
  %235 = vmatpush.msra.mxu0 %v191
  %236 = vmatpush.msra.mxu0 %v190
  %237 = vmatpush.msra.mxu0 %v189
  %238 = vmatpush.msra.mxu0 %v188
  %239 = vmatpush.msra.mxu0 %v187
  %240 = vmatpush.msra.mxu0 %v186
  %241 = vmatpush.msra.mxu0 %v185
  %242 = vmatmul.f32.gmra.mxu0 %v166
  %v243 = vpop.f32.mrf.mxu0
  %v244 = vadd.f32 %v221, %v243
  %245 = vmatmul.f32.gmra.mxu0 %v168
  %v246 = vpop.f32.mrf.mxu0
  %v247 = vadd.f32 %v224, %v246
  %248 = vdwg.mxu0
  %249 = vst [vmem:[%s7] sm:$0xff] %v244
  %250 = vst [vmem:[%s7 + $0x8] sm:$0xff] %v247
  // Predicated region
  $region30: #{forward.1} parent=0 // pred_check
    _
  $region31: #{forward.1} parent=0 // pred_check_branch
    %252 = sbr.rel (0) target = $region33
  $region32: #{forward.1} parent=0 // pred_region
    _
  $region33: #{forward.1} parent=0 // pred_fallthru
    _
  // Predicated region
  $region34: #{forward.1} parent=0 // pred_check
    _
  $region35: #{forward.1} parent=0 // pred_check_branch
    %254 = sbr.rel (0) target = $region37
  $region36: #{forward.1} parent=0 // pred_region
    _
  $region37: #{forward.1} parent=0 // pred_fallthru
    _

</llo_original>
